<compile_context>
chip_gen: v7x
topology: tpu7x:2x2x1
jax: 0.10.0
libtpu: 0.0.40
codegen_flags: <defaults>
</compile_context>

<pallas_src>
import functools

import jax
import jax.numpy as jnp
from jax.experimental import pallas as pl
from jax.experimental.pallas import tpu as pltpu

HIDDEN = 10  # fixed by the PyTorch module


def _cdiv(a, b):
    return -(-a // b)


def _round_up(a, b):
    return _cdiv(a, b) * b


def _padded_bytes(rows, cols, itemsize):
    """VMEM footprint of a [rows, cols] tile after (sublane, lane) padding."""
    sub = max(1, 32 // itemsize)          # 8 sublanes for f32, 16 for bf16
    return _round_up(rows, sub) * _round_up(cols, 128) * itemsize


def _mlp_kernel(x_ref, w1_ref, b1_ref, w2_ref, b2_ref, o_ref, *, dot_dtype):
    # Fused (block-diagonal) x @ W1 + b1 -> ReLU -> @ W2 + b2, all in VMEM.
    x = x_ref[...].astype(dot_dtype)                                    # [tile, pack*f_in]
    h = jnp.dot(x, w1_ref[...],
                preferred_element_type=jnp.float32) + b1_ref[...]       # f32 [tile, pack*H]
    ac = jnp.maximum(h, 0.0)                                            # ReLU in f32
    o = jnp.dot(ac.astype(dot_dtype), w2_ref[...],
                preferred_element_type=jnp.float32) + b2_ref[...]       # f32 [tile, pack*f_out]
    o_ref[...] = o.astype(o_ref.dtype)


def prepare_claf_params(w1, b1, w2, b2, *, dot_dtype=jnp.bfloat16):
    """One-time weight prep (hoisted off the per-call hot path).

    w1: [10, f_in], b1: [10], w2: [f_out, 10], b2: [f_out] (PyTorch nn.Linear layout).
    Builds block-diagonal weights so `pack` batch rows share one lane-dense matmul.
    """
    hidden, f_in = w1.shape
    f_out = w2.shape[0]
    pack = max(1, 128 // f_in)

    w1_t = jnp.transpose(w1).astype(jnp.float32)            # [f_in, H]
    w2_t = jnp.transpose(w2).astype(jnp.float32)            # [H, f_out]
    eye = jnp.eye(pack, dtype=jnp.float32)
    w1_blk = jnp.einsum("pq,ih->piqh", eye, w1_t).reshape(pack * f_in, pack * hidden)
    w2_blk = jnp.einsum("pq,ho->phqo", eye, w2_t).reshape(pack * hidden, pack * f_out)

    return {
        "pack": pack, "f_in": f_in, "hidden": hidden, "f_out": f_out,
        "dot_dtype": dot_dtype,
        "w1_blk": w1_blk.astype(dot_dtype),
        "w2_blk": w2_blk.astype(dot_dtype),
        "b1_row": jnp.tile(b1.astype(jnp.float32), pack).reshape(1, pack * hidden),
        "b2_row": jnp.tile(b2.astype(jnp.float32), pack).reshape(1, pack * f_out),
        # small unpacked copies for the small-batch fallback path
        "w1_t": w1_t.astype(dot_dtype),
        "w2_t": w2_t.astype(dot_dtype),
        "b1_vec": b1.astype(jnp.float32),
        "b2_vec": b2.astype(jnp.float32),
    }


def _fallback_forward(x, params):
    """Plain fused XLA path for tiny batches (same math, same operand dtypes)."""
    dd = params["dot_dtype"]
    h = jnp.dot(x.astype(dd), params["w1_t"],
                preferred_element_type=jnp.float32) + params["b1_vec"]
    ac = jnp.maximum(h, 0.0)
    return jnp.dot(ac.astype(dd), params["w2_t"],
                   preferred_element_type=jnp.float32) + params["b2_vec"]


def claf_nn_forward(x, params, *, max_tile_rows=2048, min_pallas_rows=1024):
    """ClafNN forward.  x: [N, f_in] f32 -> [N, f_out] f32."""
    n, f_in = x.shape
    assert f_in == params["f_in"]
    if n < min_pallas_rows:
        # Tiny batches: pad/launch overhead dwarfs the math; let XLA fuse it.
        return _fallback_forward(x, params)

    pack, hidden, f_out = params["pack"], params["hidden"], params["f_out"]
    dd = params["dot_dtype"]
    pf_in, ph, pf_out = pack * f_in, pack * hidden, pack * f_out

    # ---- batch-packed tiling: minimize tail padding, >=2 (even) grid steps ----
    n_rows = _cdiv(n, pack)                       # packed rows (pack batch rows each)
    n_tiles = _cdiv(n_rows, max_tile_rows)
    if n_rows >= 16:
        n_tiles = max(n_tiles, 2)                 # give both v7x TensorCores work
        if n_tiles % 2:
            n_tiles += 1                          # even step count shards cleanly on 2 TCs
    tile = _round_up(_cdiv(n_rows, n_tiles), 8)   # sublane-aligned (f32 tiles)
    n_tiles = _cdiv(n_rows, tile)
    n_rows_pad = n_tiles * tile

    pad_rows = n_rows_pad * pack - n
    x_p = jnp.pad(x, ((0, pad_rows), (0, 0))) if pad_rows else x
    x_packed = x_p.reshape(n_rows_pad, pf_in)     # free contiguous view

    # ---- VMEM budget with real lane/sublane padding (v7x has only 64 MiB) ----
    wsize = jnp.dtype(dd).itemsize
    need = (
        2 * _padded_bytes(tile, pf_in, 4)             # x tile, double-buffered
        + 2 * _padded_bytes(tile, pf_out, 4)          # out tile, double-buffered
        + 2 * (_padded_bytes(pf_in, ph, wsize) + _padded_bytes(ph, pf_out, wsize)
               + _padded_bytes(1, ph, 4) + _padded_bytes(1, pf_out, 4))  # resident params
        + _padded_bytes(tile, ph, 4)                  # h (f32)
        + _padded_bytes(tile, ph, wsize)              # ac cast
        + _padded_bytes(tile, pf_in, wsize)           # x cast
        + _padded_bytes(tile, pf_out, 4)              # o before store
        + (4 << 20)                                   # headroom
    )
    vmem_limit = int(min(max(need, 32 << 20), 48 << 20))   # 48 MB cap is v7x-safe

    cost = pl.CostEstimate(
        flops=2 * n_rows_pad * (pf_in * ph + ph * pf_out),
        transcendentals=0,
        bytes_accessed=4 * n_rows_pad * (pf_in + pf_out)
        + wsize * (pf_in * ph + ph * pf_out) + 4 * (ph + pf_out),
    )

    out = pl.pallas_call(
        functools.partial(_mlp_kernel, dot_dtype=dd),
        out_shape=jax.ShapeDtypeStruct((n_rows_pad, pf_out), jnp.float32),
        grid=(n_tiles,),
        in_specs=[
            pl.BlockSpec((tile, pf_in), lambda i: (i, 0)),     # x: streamed per tile
            pl.BlockSpec((pf_in, ph), lambda i: (0, 0)),       # W1 block-diag: resident
            pl.BlockSpec((1, ph), lambda i: (0, 0)),           # b1 (tiled): resident
            pl.BlockSpec((ph, pf_out), lambda i: (0, 0)),      # W2 block-diag: resident
            pl.BlockSpec((1, pf_out), lambda i: (0, 0)),       # b2 (tiled): resident
        ],
        out_specs=pl.BlockSpec((tile, pf_out), lambda i: (i, 0)),
        compiler_params=pltpu.CompilerParams(
            dimension_semantics=("parallel",),
            vmem_limit_bytes=vmem_limit,
        ),
        cost_estimate=cost,
    )(x_packed, params["w1_blk"], params["b1_row"], params["w2_blk"], params["b2_row"])

    out = out.reshape(n_rows_pad * pack, f_out)    # free contiguous un-pack
    return out if pad_rows == 0 else out[:n]


def claf_nn_reference(x, w1, b1, w2, b2):
    """Pure-f32 reference: exact PyTorch forward semantics."""
    h = x @ w1.T + b1
    return jnp.maximum(h, 0.0) @ w2.T + b2


def _init_linear(key, out_features, in_features):
    # Deterministic init mimicking PyTorch's default uniform(-1/sqrt(fan_in), +).
    kw, kb = jax.random.split(key)
    bound = 1.0 / jnp.sqrt(jnp.float32(in_features))
    w = jax.random.uniform(kw, (out_features, in_features),
                           minval=-bound, maxval=bound, dtype=jnp.float32)
    b = jax.random.uniform(kb, (out_features,),
                           minval=-bound, maxval=bound, dtype=jnp.float32)
    return w, b


if __name__ == "__main__":
    key = jax.random.PRNGKey(0)
    k_x, k_l1, k_l2 = jax.random.split(key, 3)

    batch, input_feature, output_feature = 8192, 4, 3

    x = jax.random.normal(k_x, (batch, input_feature), dtype=jnp.float32)
    w1, b1 = _init_linear(k_l1, HIDDEN, input_feature)          # hidden_layer
    w2, b2 = _init_linear(k_l2, output_feature, HIDDEN)         # output_layer

    params = prepare_claf_params(w1, b1, w2, b2)                # bf16 MXU operands, f32 acc
    out = jax.block_until_ready(claf_nn_forward(x, params))
    assert out.shape == (batch, output_feature)

    # References: exact f32 math (PyTorch semantics) and the same bf16-operand math.
    ref_f32 = claf_nn_reference(x, w1, b1, w2, b2)
    ref_bf16 = _fallback_forward(x, params)
    assert jnp.allclose(out, ref_bf16, atol=1e-2, rtol=1e-2)    # packing math is correct
    assert jnp.allclose(out, ref_f32, atol=5e-2, rtol=5e-2)     # bf16-vs-f32 numerics

    # Pallas path with a ragged batch (exercises pack/tile tail padding).
    out_ragged = jax.block_until_ready(claf_nn_forward(x[:5000], params))
    assert out_ragged.shape == (5000, output_feature)
    assert jnp.allclose(out_ragged, ref_bf16[:5000], atol=1e-2, rtol=1e-2)

    # Small-batch fallback path (plain XLA) still matches.
    out_small = jax.block_until_ready(claf_nn_forward(x[:8], params))
    assert out_small.shape == (8, output_feature)
    assert jnp.allclose(out_small, ref_bf16[:8], atol=1e-2, rtol=1e-2)

    print("KERNEL_OK")
</pallas_src>

<mosaic_0001>
module attributes {stable_mosaic.version = 11 : i64} {
  func.func @_mlp_kernel(%arg0: i32, %arg1: memref<128x128xf32, #tpu.memory_space<vmem>>, %arg2: memref<128x320xbf16, #tpu.memory_space<vmem>>, %arg3: memref<1x320xf32, #tpu.memory_space<vmem>>, %arg4: memref<320x96xbf16, #tpu.memory_space<vmem>>, %arg5: memref<1x96xf32, #tpu.memory_space<vmem>>, %arg6: memref<128x96xf32, #tpu.memory_space<vmem>>) attributes {dimension_semantics = [#tpu.dimension_semantics<parallel>], iteration_bounds = array<i64: 2>, scalar_prefetch = 0 : i64, scratch_operands = 0 : i64, tpu.core_type = #tpu.core_type<tc>, window_params = [{transform_indices = @transform_0, window_bounds = array<i64: 128, 128>}, {pipeline_mode = #tpu.pipeline_mode<synchronous>, transform_indices = @transform_1, window_bounds = array<i64: 128, 320>}, {pipeline_mode = #tpu.pipeline_mode<synchronous>, transform_indices = @transform_2, window_bounds = array<i64: 1, 320>}, {pipeline_mode = #tpu.pipeline_mode<synchronous>, transform_indices = @transform_3, window_bounds = array<i64: 320, 96>}, {pipeline_mode = #tpu.pipeline_mode<synchronous>, transform_indices = @transform_4, window_bounds = array<i64: 1, 96>}, {transform_indices = @transform_5, window_bounds = array<i64: 128, 96>}]} {
    %c0 = arith.constant 0 : index
    %c0_0 = arith.constant 0 : index
    %0 = vector.load %arg1[%c0, %c0_0] : memref<128x128xf32, #tpu.memory_space<vmem>>, vector<128x128xf32>
    %1 = arith.truncf %0 : vector<128x128xf32> to vector<128x128xbf16>
    %c0_1 = arith.constant 0 : index
    %c0_2 = arith.constant 0 : index
    %2 = vector.load %arg2[%c0_1, %c0_2] : memref<128x320xbf16, #tpu.memory_space<vmem>>, vector<128x320xbf16>
    %cst = arith.constant dense<0.000000e+00> : vector<128x320xf32>
    %3 = tpu.matmul %1, %2, %cst {dimension_numbers = #tpu.dot_dimension_numbers<[1], [0], [0], [1], [0, 0, 1, 1], [], []>} : vector<128x128xbf16>, vector<128x320xbf16>, vector<128x320xf32> -> vector<128x320xf32>
    %c0_3 = arith.constant 0 : index
    %c0_4 = arith.constant 0 : index
    %4 = vector.load %arg3[%c0_3, %c0_4] : memref<1x320xf32, #tpu.memory_space<vmem>>, vector<1x320xf32>
    %5 = vector.broadcast %4 : vector<1x320xf32> to vector<128x320xf32>
    %6 = arith.addf %3, %5 : vector<128x320xf32>
    %cst_5 = arith.constant 0.000000e+00 : f32
    %7 = vector.broadcast %cst_5 : f32 to vector<128x320xf32>
    %8 = arith.maximumf %6, %7 : vector<128x320xf32>
    %9 = arith.truncf %8 : vector<128x320xf32> to vector<128x320xbf16>
    %c0_6 = arith.constant 0 : index
    %c0_7 = arith.constant 0 : index
    %10 = vector.load %arg4[%c0_6, %c0_7] : memref<320x96xbf16, #tpu.memory_space<vmem>>, vector<320x96xbf16>
    %cst_8 = arith.constant dense<0.000000e+00> : vector<128x96xf32>
    %11 = tpu.matmul %9, %10, %cst_8 {dimension_numbers = #tpu.dot_dimension_numbers<[1], [0], [0], [1], [0, 0, 1, 1], [], []>} : vector<128x320xbf16>, vector<320x96xbf16>, vector<128x96xf32> -> vector<128x96xf32>
    %c0_9 = arith.constant 0 : index
    %c0_10 = arith.constant 0 : index
    %12 = vector.load %arg5[%c0_9, %c0_10] : memref<1x96xf32, #tpu.memory_space<vmem>>, vector<1x96xf32>
    %13 = vector.broadcast %12 : vector<1x96xf32> to vector<128x96xf32>
    %14 = arith.addf %11, %13 : vector<128x96xf32>
    %c0_11 = arith.constant 0 : index
    %c0_12 = arith.constant 0 : index
    %15 = vector.load %arg6[%c0_11, %c0_12] : memref<128x96xf32, #tpu.memory_space<vmem>>, vector<128x96xf32>
    tpu.vector_store %arg6[%c0_11, %c0_12], %14 {strides = array<i32>} : memref<128x96xf32, #tpu.memory_space<vmem>>, vector<128x96xf32>,
    return
  }
  func.func @transform_0(%arg0: i32) -> (i32, i32) {
    %c0_i32 = arith.constant 0 : i32
    %c0_i32_0 = arith.constant 0 : i32
    return %arg0, %c0_i32 : i32, i32
  }
  func.func @transform_1(%arg0: i32) -> (i32, i32) {
    %c0_i32 = arith.constant 0 : i32
    %c0_i32_0 = arith.constant 0 : i32
    %c0_i32_1 = arith.constant 0 : i32
    return %c0_i32, %c0_i32_0 : i32, i32
  }
  func.func @transform_2(%arg0: i32) -> (i32, i32) {
    %c0_i32 = arith.constant 0 : i32
    %c0_i32_0 = arith.constant 0 : i32
    %c0_i32_1 = arith.constant 0 : i32
    return %c0_i32, %c0_i32_0 : i32, i32
  }
  func.func @transform_3(%arg0: i32) -> (i32, i32) {
    %c0_i32 = arith.constant 0 : i32
    %c0_i32_0 = arith.constant 0 : i32
    %c0_i32_1 = arith.constant 0 : i32
    return %c0_i32, %c0_i32_0 : i32, i32
  }
  func.func @transform_4(%arg0: i32) -> (i32, i32) {
    %c0_i32 = arith.constant 0 : i32
    %c0_i32_0 = arith.constant 0 : i32
    %c0_i32_1 = arith.constant 0 : i32
    return %c0_i32, %c0_i32_0 : i32, i32
  }
  func.func @transform_5(%arg0: i32) -> (i32, i32) {
    %c0_i32 = arith.constant 0 : i32
    %c0_i32_0 = arith.constant 0 : i32
    return %arg0, %c0_i32 : i32, i32
  }
}

</mosaic_0001>

<llo_original>
// kernel: tpu_custom_call.1
$region0: #{tpu_custom_call.1}
  #allocation0 [shape = 'u32[]', space=smem, size = 0x4, offset = 0x4, fixed_abs, tag = 'smem constant byte address 0x4 - core index']
  #allocation1 [shape = 'u32[144,128]{1,0:T(1,128)}', space=vmem, size = 0x12000, scoped, tag = 'internal scratch']
  %s0 = inlined_call_operand.vmem [shape: f32[256,128], index: 0, kind: input, shape index: {}]
  %s1 = inlined_call_operand.vmem [shape: bf16[128,320], index: 1, kind: input, shape index: {}]
  %s2 = inlined_call_operand.vmem [shape: f32[1,320], index: 2, kind: input, shape index: {}]
  %s3 = inlined_call_operand.vmem [shape: bf16[320,96], index: 3, kind: input, shape index: {}]
  %s4 = inlined_call_operand.vmem [shape: f32[1,96], index: 4, kind: input, shape index: {}]
  %s5 = inlined_call_operand.vmem [shape: f32[256,96], index: 5, kind: output, shape index: {}]
  %s6 = sld [smem:[#allocation0]]
  $region53: #{tpu_custom_call.1} parent=0
    _
  %s8 = ssub.s32 1, %s6
  %s9 = scalar_select 0, %s8, %s6
  loop: start=0, step=1, limit=4
  $region2: #{tpu_custom_call.1} parent=0 // loop_pre_header
    _
  $region3: #{tpu_custom_call.1} parent=0 // loop_header
    %s11 = sphi 0, %s15
    %p12 = scmp.ge.s32.totalorder %s11, 4
    %s21 = sphi 0, %s23
    %s24 = sphi 0, %s21
    %s25 = sphi 0, %s24
    %s41 = sphi 0, %s25
    %s45 = sphi 0, %s45
    %s47 = sphi 0, %s45
    %s48 = sphi 0, %s47
    %s62 = sphi 0, %s48
    %s66 = sphi 0, %s66
    %s68 = sphi 0, %s66
    %s69 = sphi 0, %s68
    %s83 = sphi 0, %s69
    %s87 = sphi 0, %s87
    %s89 = sphi 0, %s87
    %s90 = sphi 0, %s89
    %s104 = sphi 0, %s90
    %s108 = sphi 0, %s108
    %s110 = sphi 0, %s108
    %s111 = sphi 0, %s110
    %s125 = sphi 0, %s111
    %s131 = sphi 0, %s133
    %s134 = sphi 0, %s131
    %s135 = sphi 0, %s134
    %s151 = sphi 0, %s135
  $region4: #{tpu_custom_call.1} parent=0 // loop_header_branch
    %14 = sbr.rel (%p12) target = $region8
  $region5: #{tpu_custom_call.1} parent=0 // loop_body
    %s16 = ssub.s32 %s11, 1
    %s17 = ssub.s32 %s11, 2
    %s18 = sadd.s32 %s11, 1
    %s19 = ssub.s32 %s11, %s18
    %p20 = scmp.eq.s32.totalorder %s19, 0
    %s22 = sadd.s32 %s21, 1
    %s23 = scalar_select %p20, %s21, %s22
    %p26 = pneg %p20
    %p27 = scmp.eq.s32.totalorder %s11, 1
    %p28 = por %p26, %p27
    %p29 = scmp.ne.s32.totalorder %s21, %s24
    %p30 = scmp.eq.s32.totalorder %s11, 0
    %p31 = por %p29, %p30
    %p32 = scmp.ne.s32.totalorder %s21, %s24
    %p33 = scmp.eq.s32.totalorder %s16, 1
    %p34 = por %p32, %p33
    %p35 = scmp.ne.s32.totalorder %s24, %s25
    %p36 = scmp.eq.s32.totalorder %s16, 0
    %p37 = por %p35, %p36
    %p38 = scmp.ne.s32.totalorder %s24, %s25
    %p39 = scmp.eq.s32.totalorder %s17, 1
    %p40 = por %p38, %p39
    %p42 = scmp.ne.s32.totalorder %s25, %s41
    %p43 = scmp.eq.s32.totalorder %s17, 0
    %p44 = por %p42, %p43
    %s46 = sadd.s32 %s45, 1
    %p49 = scmp.eq.s32.totalorder %s11, 1
    %p50 = scmp.ne.s32.totalorder %s45, %s47
    %p51 = scmp.eq.s32.totalorder %s11, 0
    %p52 = por %p50, %p51
    %p53 = scmp.ne.s32.totalorder %s45, %s47
    %p54 = scmp.eq.s32.totalorder %s16, 1
    %p55 = por %p53, %p54
    %p56 = scmp.ne.s32.totalorder %s47, %s48
    %p57 = scmp.eq.s32.totalorder %s16, 0
    %p58 = por %p56, %p57
    %p59 = scmp.ne.s32.totalorder %s47, %s48
    %p60 = scmp.eq.s32.totalorder %s17, 1
    %p61 = por %p59, %p60
    %p63 = scmp.ne.s32.totalorder %s48, %s62
    %p64 = scmp.eq.s32.totalorder %s17, 0
    %p65 = por %p63, %p64
    %s67 = sadd.s32 %s66, 1
    %p70 = scmp.eq.s32.totalorder %s11, 1
    %p71 = scmp.ne.s32.totalorder %s66, %s68
    %p72 = scmp.eq.s32.totalorder %s11, 0
    %p73 = por %p71, %p72
    %p74 = scmp.ne.s32.totalorder %s66, %s68
    %p75 = scmp.eq.s32.totalorder %s16, 1
    %p76 = por %p74, %p75
    %p77 = scmp.ne.s32.totalorder %s68, %s69
    %p78 = scmp.eq.s32.totalorder %s16, 0
    %p79 = por %p77, %p78
    %p80 = scmp.ne.s32.totalorder %s68, %s69
    %p81 = scmp.eq.s32.totalorder %s17, 1
    %p82 = por %p80, %p81
    %p84 = scmp.ne.s32.totalorder %s69, %s83
    %p85 = scmp.eq.s32.totalorder %s17, 0
    %p86 = por %p84, %p85
    %s88 = sadd.s32 %s87, 1
    %p91 = scmp.eq.s32.totalorder %s11, 1
    %p92 = scmp.ne.s32.totalorder %s87, %s89
    %p93 = scmp.eq.s32.totalorder %s11, 0
    %p94 = por %p92, %p93
    %p95 = scmp.ne.s32.totalorder %s87, %s89
    %p96 = scmp.eq.s32.totalorder %s16, 1
    %p97 = por %p95, %p96
    %p98 = scmp.ne.s32.totalorder %s89, %s90
    %p99 = scmp.eq.s32.totalorder %s16, 0
    %p100 = por %p98, %p99
    %p101 = scmp.ne.s32.totalorder %s89, %s90
    %p102 = scmp.eq.s32.totalorder %s17, 1
    %p103 = por %p101, %p102
    %p105 = scmp.ne.s32.totalorder %s90, %s104
    %p106 = scmp.eq.s32.totalorder %s17, 0
    %p107 = por %p105, %p106
    %s109 = sadd.s32 %s108, 1
    %p112 = scmp.eq.s32.totalorder %s11, 1
    %p113 = scmp.ne.s32.totalorder %s108, %s110
    %p114 = scmp.eq.s32.totalorder %s11, 0
    %p115 = por %p113, %p114
    %p116 = scmp.ne.s32.totalorder %s108, %s110
    %p117 = scmp.eq.s32.totalorder %s16, 1
    %p118 = por %p116, %p117
    %p119 = scmp.ne.s32.totalorder %s110, %s111
    %p120 = scmp.eq.s32.totalorder %s16, 0
    %p121 = por %p119, %p120
    %p122 = scmp.ne.s32.totalorder %s110, %s111
    %p123 = scmp.eq.s32.totalorder %s17, 1
    %p124 = por %p122, %p123
    %p126 = scmp.ne.s32.totalorder %s111, %s125
    %p127 = scmp.eq.s32.totalorder %s17, 0
    %p128 = por %p126, %p127
    %s129 = ssub.s32 %s11, %s18
    %p130 = scmp.eq.s32.totalorder %s129, 0
    %s132 = sadd.s32 %s131, 1
    %s133 = scalar_select %p130, %s131, %s132
    %p136 = pneg %p130
    %p137 = scmp.eq.s32.totalorder %s11, 1
    %p138 = por %p136, %p137
    %p139 = scmp.ne.s32.totalorder %s131, %s134
    %p140 = scmp.eq.s32.totalorder %s11, 0
    %p141 = por %p139, %p140
    %p142 = scmp.ne.s32.totalorder %s131, %s134
    %p143 = scmp.eq.s32.totalorder %s16, 1
    %p144 = por %p142, %p143
    %p145 = scmp.ne.s32.totalorder %s134, %s135
    %p146 = scmp.eq.s32.totalorder %s16, 0
    %p147 = por %p145, %p146
    %p148 = scmp.ne.s32.totalorder %s134, %s135
    %p149 = scmp.eq.s32.totalorder %s17, 1
    %p150 = por %p148, %p149
    %p152 = scmp.ne.s32.totalorder %s135, %s151
    %p153 = scmp.eq.s32.totalorder %s17, 0
    %p154 = por %p152, %p153
    %p155 = scmp.le.s32.totalorder 1, %s11
    %p156 = scmp.lt.s32.totalorder %s11, 3
    %p157 = pnand %p155, %p156
    %p158 = pneg %p157
    // Predicated region
    $region9: #{tpu_custom_call.1} parent=5 // pred_check
      _
    $region10: #{tpu_custom_call.1} parent=5 // pred_check_branch
      %160 = sbr.rel (%p157) target = $region12
    $region11: #{tpu_custom_call.1} parent=5 // pred_region
      %s161 = ssub.s32 %s11, 1
      // Predicated region
      $region13: #{tpu_custom_call.1} parent=11 // pred_check
        %p162 = pneg %p58
      $region14: #{tpu_custom_call.1} parent=11 // pred_check_branch
        %164 = sbr.rel (%p162) target = $region16
      $region15: #{tpu_custom_call.1} parent=11 // pred_region
        _
      $region16: #{tpu_custom_call.1} parent=11 // pred_fallthru
        _
      // Predicated region
      $region17: #{tpu_custom_call.1} parent=11 // pred_check
        %p165 = pneg %p79
      $region18: #{tpu_custom_call.1} parent=11 // pred_check_branch
        %167 = sbr.rel (%p165) target = $region20
      $region19: #{tpu_custom_call.1} parent=11 // pred_region
        _
      $region20: #{tpu_custom_call.1} parent=11 // pred_fallthru
        _
      // Predicated region
      $region21: #{tpu_custom_call.1} parent=11 // pred_check
        %p168 = pneg %p100
      $region22: #{tpu_custom_call.1} parent=11 // pred_check_branch
        %170 = sbr.rel (%p168) target = $region24
      $region23: #{tpu_custom_call.1} parent=11 // pred_region
        _
      $region24: #{tpu_custom_call.1} parent=11 // pred_fallthru
        _
      // Predicated region
      $region25: #{tpu_custom_call.1} parent=11 // pred_check
        %p171 = pneg %p121
      $region26: #{tpu_custom_call.1} parent=11 // pred_check_branch
        %173 = sbr.rel (%p171) target = $region28
      $region27: #{tpu_custom_call.1} parent=11 // pred_region
        _
      $region28: #{tpu_custom_call.1} parent=11 // pred_fallthru
        _
    $region12: #{tpu_custom_call.1} parent=5 // pred_fallthru
      _
    %p174 = scmp.lt.s32.totalorder %s11, 2
    // Predicated region
    $region29: #{tpu_custom_call.1} parent=5 // pred_check
      %p175 = pneg %p174
    $region30: #{tpu_custom_call.1} parent=5 // pred_check_branch
      %177 = sbr.rel (%p175) target = $region32
    $region31: #{tpu_custom_call.1} parent=5 // pred_region
      // Predicated region
      $region33: #{tpu_custom_call.1} parent=31 // pred_check
        %p178 = pneg %p31
      $region34: #{tpu_custom_call.1} parent=31 // pred_check_branch
        %180 = sbr.rel (%p178) target = $region36
      $region35: #{tpu_custom_call.1} parent=31 // pred_region
        %s181 = smul.u32 16, %s11
        %p182 = scmp.lt.s32.totalorder %s181, 31
        %s183 = scalar_select %p182, %s181, 31
        %s184 = smul.addr %s183, 8
        %s185 = scalar_lea.vmem %s0, %s184
        %s186 = smul.u32 16, %s11
      $region36: #{tpu_custom_call.1} parent=31 // pred_fallthru
        _
    $region32: #{tpu_custom_call.1} parent=5 // pred_fallthru
      _
    %p187 = scmp.le.s32.totalorder 1, %s11
    %p188 = scmp.lt.s32.totalorder %s11, 3
    %p189 = pnand %p187, %p188
    %p190 = pneg %p189
    // Predicated region
    $region37: #{tpu_custom_call.1} parent=5 // pred_check
      _
    $region38: #{tpu_custom_call.1} parent=5 // pred_check_branch
      %192 = sbr.rel (%p189) target = $region40
    $region39: #{tpu_custom_call.1} parent=5 // pred_region
      %s193 = ssub.s32 %s11, 1
      %s194 = smul.u32 16, %s16
      %p195 = scmp.lt.s32.totalorder %s194, 31
      %s196 = scalar_select %p195, %s194, 31
      %s197 = smul.addr %s196, 8
      %s198 = scalar_lea.vmem %s0, %s197
      %p199 = pneg %p37
      %p200 = pneg %p34
      %p201 = pneg %p58
      %p202 = pneg %p55
      %p203 = pneg %p79
      %p204 = pneg %p76
      %p205 = pneg %p100
      %p206 = pneg %p97
      %p207 = pneg %p121
      %p208 = pneg %p118
      %p209 = pneg %p147
      %p210 = pneg %p144
      %s211 = smul.u32 16, %s16
      %p212 = scmp.lt.s32.totalorder %s211, 31
      %s213 = scalar_select %p212, %s211, 31
      %s214 = smul.addr %s213, 8
      %s215 = scalar_lea.vmem %s5, %s214
      %s216 = smul.u32 16, %s16
      %p217 = scmp.lt.s32.totalorder %s216, 31
      %s218 = scalar_select %p217, %s216, 31
      %s219 = smul.addr %s218, 8
      %s220 = scalar_lea.vmem %s0, %s219
      %s221 = smul.u32 16, %s16
      %s222 = smul.u32 16, %s16
      %p223 = scmp.lt.s32.totalorder %s222, 31
      %s224 = scalar_select %p223, %s222, 31
      %s225 = smul.addr %s224, 8
      %s226 = scalar_lea.vmem %s5, %s225
      %s227 = smul.u32 16, %s16
      %v229 = vld [vmem:[%s220] sm:$0xff]
      %v230 = vld [vmem:[%s220 + $0x8] sm:$0xff]
      %v231 = vld [vmem:[%s220 + $0x10] sm:$0xff]
      %v232 = vld [vmem:[%s220 + $0x18] sm:$0xff]
      %v233 = vld [vmem:[%s220 + $0x20] sm:$0xff]
      %v234 = vld [vmem:[%s220 + $0x28] sm:$0xff]
      %v235 = vld [vmem:[%s220 + $0x30] sm:$0xff]
      %v236 = vld [vmem:[%s220 + $0x38] sm:$0xff]
      %v237 = vld [vmem:[%s220 + $0x40] sm:$0xff]
      %v238 = vld [vmem:[%s220 + $0x48] sm:$0xff]
      %v239 = vld [vmem:[%s220 + $0x50] sm:$0xff]
      %v240 = vld [vmem:[%s220 + $0x58] sm:$0xff]
      %v241 = vld [vmem:[%s220 + $0x60] sm:$0xff]
      %v242 = vld [vmem:[%s220 + $0x68] sm:$0xff]
      %v243 = vld [vmem:[%s220 + $0x70] sm:$0xff]
      %v244 = vld [vmem:[%s220 + $0x78] sm:$0xff]
      %v245 = vpack.c.bf16 %v230, %v229
      %v246 = vpack.c.bf16 %v232, %v231
      %v247 = vpack.c.bf16 %v234, %v233
      %v248 = vpack.c.bf16 %v236, %v235
      %v249 = vpack.c.bf16 %v238, %v237
      %v250 = vpack.c.bf16 %v240, %v239
      %v251 = vpack.c.bf16 %v242, %v241
      %v252 = vpack.c.bf16 %v244, %v243
      %v253 = vld [vmem:[%s1] sm:$0xff]
      %v254 = vld [vmem:[%s1 + $0x8] sm:$0xf]
      %v255 = vld [vmem:[%s1 + $0xc] sm:$0xff]
      %v256 = vld [vmem:[%s1 + $0x14] sm:$0xf]
      %v257 = vld [vmem:[%s1 + $0x18] sm:$0xff]
      %v258 = vld [vmem:[%s1 + $0x20] sm:$0xf]
      %v259 = vld [vmem:[%s1 + $0x24] sm:$0xff]
      %v260 = vld [vmem:[%s1 + $0x2c] sm:$0xf]
      %v261 = vld [vmem:[%s1 + $0x30] sm:$0xff]
      %v262 = vld [vmem:[%s1 + $0x38] sm:$0xf]
      %v263 = vld [vmem:[%s1 + $0x3c] sm:$0xff]
      %v264 = vld [vmem:[%s1 + $0x44] sm:$0xf]
      %v265 = vld [vmem:[%s1 + $0x48] sm:$0xff]
      %v266 = vld [vmem:[%s1 + $0x50] sm:$0xf]
      %v267 = vld [vmem:[%s1 + $0x54] sm:$0xff]
      %v268 = vld [vmem:[%s1 + $0x5c] sm:$0xf]
      %v269 = vld [vmem:[%s1 + $0x60] sm:$0xff]
      %v270 = vld [vmem:[%s1 + $0x68] sm:$0xf]
      %v271 = vld [vmem:[%s1 + $0x6c] sm:$0xff]
      %v272 = vld [vmem:[%s1 + $0x74] sm:$0xf]
      %v273 = vld [vmem:[%s1 + $0x78] sm:$0xff]
      %v274 = vld [vmem:[%s1 + $0x80] sm:$0xf]
      %v275 = vld [vmem:[%s1 + $0x84] sm:$0xff]
      %v276 = vld [vmem:[%s1 + $0x8c] sm:$0xf]
      %v277 = vld [vmem:[%s1 + $0x90] sm:$0xff]
      %v278 = vld [vmem:[%s1 + $0x98] sm:$0xf]
      %v279 = vld [vmem:[%s1 + $0x9c] sm:$0xff]
      %v280 = vld [vmem:[%s1 + $0xa4] sm:$0xf]
      %v281 = vld [vmem:[%s1 + $0xa8] sm:$0xff]
      %v282 = vld [vmem:[%s1 + $0xb0] sm:$0xf]
      %v283 = vld [vmem:[%s1 + $0xb4] sm:$0xff]
      %v284 = vld [vmem:[%s1 + $0xbc] sm:$0xf]
      %v285 = vld [vmem:[%s2] sm:$0x7]
      %v287 = vlaneseq
      %v288 = vshrl.u32 %v287, 7
      %v289 = vsub.s32 0, %v288
      %v290 = vrot.slane %v285, %v289
      %v291 = vlaneseq
      %v292 = vshrl.u32 %v291, 7
      %v293 = vsub.s32 1, %v292
      %v294 = vrot.slane %v285, %v293
      %v295 = vlaneseq
      %v296 = vshrl.u32 %v295, 7
      %v297 = vsub.s32 2, %v296
      %v298 = vrot.slane %v285, %v297
      %v334 = vunpack.c.l.b16 %v253
      %v335 = vunpack.c.h.b16 %v253
      %v336 = vunpack.c.l.b16 %v254
      %v337 = vunpack.c.l.b16 %v255
      %v338 = vunpack.c.h.b16 %v255
      %v339 = vunpack.c.l.b16 %v256
      %v340 = vunpack.c.l.b16 %v257
      %v341 = vunpack.c.h.b16 %v257
      %v342 = vunpack.c.l.b16 %v258
      %v343 = vunpack.c.l.b16 %v259
      %v344 = vunpack.c.h.b16 %v259
      %v345 = vunpack.c.l.b16 %v260
      %v346 = vunpack.c.l.b16 %v261
      %v347 = vunpack.c.h.b16 %v261
      %v348 = vunpack.c.l.b16 %v262
      %v349 = vunpack.c.l.b16 %v263
      %v350 = vunpack.c.h.b16 %v263
      %v351 = vunpack.c.l.b16 %v264
      %v352 = vunpack.c.l.b16 %v265
      %v353 = vunpack.c.h.b16 %v265
      %v354 = vunpack.c.l.b16 %v266
      %v355 = vunpack.c.l.b16 %v267
      %v356 = vunpack.c.h.b16 %v267
      %v357 = vunpack.c.l.b16 %v268
      %v358 = vunpack.c.l.b16 %v269
      %v359 = vunpack.c.h.b16 %v269
      %v360 = vunpack.c.l.b16 %v270
      %v361 = vunpack.c.l.b16 %v271
      %v362 = vunpack.c.h.b16 %v271
      %v363 = vunpack.c.l.b16 %v272
      %v364 = vunpack.c.l.b16 %v273
      %v365 = vunpack.c.h.b16 %v273
      %v366 = vunpack.c.l.b16 %v274
      %v367 = vunpack.c.l.b16 %v275
      %v368 = vunpack.c.h.b16 %v275
      %v369 = vunpack.c.l.b16 %v276
      %v370 = vunpack.c.l.b16 %v277
      %v371 = vunpack.c.h.b16 %v277
      %v372 = vunpack.c.l.b16 %v278
      %v373 = vunpack.c.l.b16 %v279
      %v374 = vunpack.c.h.b16 %v279
      %v375 = vunpack.c.l.b16 %v280
      %v376 = vunpack.c.l.b16 %v281
      %v377 = vunpack.c.h.b16 %v281
      %v378 = vunpack.c.l.b16 %v282
      %v379 = vunpack.c.l.b16 %v283
      %v380 = vunpack.c.h.b16 %v283
      %v381 = vunpack.c.l.b16 %v284
      %v382 = vpack.c.b16 %v337, %v334
      %v383 = vpack.c.b16 %v338, %v335
      %v384 = vpack.c.b16 %v339, %v336
      %v385 = vpack.c.b16 %v343, %v340
      %v386 = vpack.c.b16 %v344, %v341
      %v387 = vpack.c.b16 %v345, %v342
      %v388 = vpack.c.b16 %v349, %v346
      %v389 = vpack.c.b16 %v350, %v347
      %v390 = vpack.c.b16 %v351, %v348
      %v391 = vpack.c.b16 %v355, %v352
      %v392 = vpack.c.b16 %v356, %v353
      %v393 = vpack.c.b16 %v357, %v354
      %v394 = vpack.c.b16 %v361, %v358
      %v395 = vpack.c.b16 %v362, %v359
      %v396 = vpack.c.b16 %v363, %v360
      %v397 = vpack.c.b16 %v367, %v364
      %v398 = vpack.c.b16 %v368, %v365
      %v399 = vpack.c.b16 %v369, %v366
      %v400 = vpack.c.b16 %v373, %v370
      %v401 = vpack.c.b16 %v374, %v371
      %v402 = vpack.c.b16 %v375, %v372
      %v403 = vpack.c.b16 %v379, %v376
      %v404 = vpack.c.b16 %v380, %v377
      %v405 = vpack.c.b16 %v381, %v378
      %430 = vmatprep.subr.bf16.mxu0 %v383
      %431 = vmatpush1.bf16.msra.mxu0 %v382
      %432 = vmatprep.subr.bf16.mxu0 %v386
      %433 = vmatpush1.bf16.msra.mxu0 %v385
      %434 = vmatprep.subr.bf16.mxu0 %v389
      %435 = vmatpush1.bf16.msra.mxu0 %v388
      %436 = vmatprep.subr.bf16.mxu0 %v392
      %437 = vmatpush1.bf16.msra.mxu0 %v391
      %438 = vmatprep.subr.bf16.mxu0 %v395
      %439 = vmatpush1.bf16.msra.mxu0 %v394
      %440 = vmatprep.subr.bf16.mxu0 %v398
      %441 = vmatpush1.bf16.msra.mxu0 %v397
      %442 = vmatprep.subr.bf16.mxu0 %v401
      %443 = vmatpush1.bf16.msra.mxu0 %v400
      %444 = vmatprep.subr.bf16.mxu0 %v404
      %445 = vmatpush1.bf16.msra.mxu0 %v403
      %446 = vmatprep.subr.bf16.mxu0 0
      %447 = vmatpush1.bf16.msra.mxu0 0
      %448 = vmatprep.subr.bf16.mxu0 0
      %449 = vmatpush1.bf16.msra.mxu0 0
      %450 = vmatprep.subr.bf16.mxu0 0
      %451 = vmatpush1.bf16.msra.mxu0 0
      %452 = vmatprep.subr.bf16.mxu0 0
      %453 = vmatpush1.bf16.msra.mxu0 0
      %454 = vmatprep.subr.bf16.mxu0 0
      %455 = vmatpush1.bf16.msra.mxu0 0
      %456 = vmatprep.subr.bf16.mxu0 0
      %457 = vmatpush1.bf16.msra.mxu0 0
      %458 = vmatprep.subr.bf16.mxu0 0
      %459 = vmatpush1.bf16.msra.mxu0 0
      %460 = vmatprep.subr.bf16.mxu0 0
      %461 = vmatpush1.bf16.msra.mxu0 0
      %462 = vmatprep.mubr.bf16.mxu0 0
      %463 = vmatmul.mubr.bf16.gmra.mrb[0].mxu0 %v245
      %v464 = vpop.f32.mrb[0].mxu0
      %v465 = vadd.f32 %v290, %v464
      %v466 = vpop.f32.mrb[0].mxu0
      %v467 = vadd.f32 %v294, %v466
      %v468 = vpop.f32.mrb[0].mxu0
      %v469 = vadd.f32 %v290, %v468
      %v470 = vpop.f32.mrb[0].mxu0
      %v471 = vadd.f32 %v294, %v470
      %472 = vmatprep.mubr.bf16.mxu0 0
      %473 = vmatmul.mubr.bf16.gmra.mrb[0].mxu0 %v246
      %v474 = vpop.f32.mrb[0].mxu0
      %v475 = vadd.f32 %v290, %v474
      %v476 = vpop.f32.mrb[0].mxu0
      %v477 = vadd.f32 %v294, %v476
      %v478 = vpop.f32.mrb[0].mxu0
      %v479 = vadd.f32 %v290, %v478
      %v480 = vpop.f32.mrb[0].mxu0
      %v481 = vadd.f32 %v294, %v480
      %482 = vmatprep.mubr.bf16.mxu0 0
      %483 = vmatmul.mubr.bf16.gmra.mrb[0].mxu0 %v247
      %v484 = vpop.f32.mrb[0].mxu0
      %v485 = vadd.f32 %v290, %v484
      %v486 = vpop.f32.mrb[0].mxu0
      %v487 = vadd.f32 %v294, %v486
      %v488 = vpop.f32.mrb[0].mxu0
      %v489 = vadd.f32 %v290, %v488
      %v490 = vpop.f32.mrb[0].mxu0
      %v491 = vadd.f32 %v294, %v490
      %492 = vmatprep.mubr.bf16.mxu0 0
      %493 = vmatmul.mubr.bf16.gmra.mrb[0].mxu0 %v248
      %v494 = vpop.f32.mrb[0].mxu0
      %v495 = vadd.f32 %v290, %v494
      %v496 = vpop.f32.mrb[0].mxu0
      %v497 = vadd.f32 %v294, %v496
      %v498 = vpop.f32.mrb[0].mxu0
      %v499 = vadd.f32 %v290, %v498
      %v500 = vpop.f32.mrb[0].mxu0
      %v501 = vadd.f32 %v294, %v500
      %502 = vmatprep.mubr.bf16.mxu0 0
      %503 = vmatmul.mubr.bf16.gmra.mrb[0].mxu0 %v249
      %v504 = vpop.f32.mrb[0].mxu0
      %v505 = vadd.f32 %v290, %v504
      %v506 = vpop.f32.mrb[0].mxu0
      %v507 = vadd.f32 %v294, %v506
      %v508 = vpop.f32.mrb[0].mxu0
      %v509 = vadd.f32 %v290, %v508
      %v510 = vpop.f32.mrb[0].mxu0
      %v511 = vadd.f32 %v294, %v510
      %512 = vmatprep.mubr.bf16.mxu0 0
      %513 = vmatmul.mubr.bf16.gmra.mrb[0].mxu0 %v250
      %v514 = vpop.f32.mrb[0].mxu0
      %v515 = vadd.f32 %v290, %v514
      %v516 = vpop.f32.mrb[0].mxu0
      %v517 = vadd.f32 %v294, %v516
      %v518 = vpop.f32.mrb[0].mxu0
      %v519 = vadd.f32 %v290, %v518
      %v520 = vpop.f32.mrb[0].mxu0
      %v521 = vadd.f32 %v294, %v520
      %522 = vmatprep.mubr.bf16.mxu0 0
      %523 = vmatmul.mubr.bf16.gmra.mrb[0].mxu0 %v251
      %v524 = vpop.f32.mrb[0].mxu0
      %v525 = vadd.f32 %v290, %v524
      %v526 = vpop.f32.mrb[0].mxu0
      %v527 = vadd.f32 %v294, %v526
      %v528 = vpop.f32.mrb[0].mxu0
      %v529 = vadd.f32 %v290, %v528
      %v530 = vpop.f32.mrb[0].mxu0
      %v531 = vadd.f32 %v294, %v530
      %532 = vmatprep.mubr.bf16.mxu0 0
      %533 = vmatmul.mubr.bf16.gmra.mrb[0].mxu0 %v252
      %v534 = vpop.f32.mrb[0].mxu0
      %v535 = vadd.f32 %v290, %v534
      %v536 = vpop.f32.mrb[0].mxu0
      %v537 = vadd.f32 %v294, %v536
      %v538 = vpop.f32.mrb[0].mxu0
      %v539 = vadd.f32 %v290, %v538
      %v540 = vpop.f32.mrb[0].mxu0
      %v541 = vadd.f32 %v294, %v540
      %542 = vdwg.mxu0
      %543 = vmatprep.subr.bf16.mxu0 0
      %544 = vmatpush1.bf16.msra.mxu0 %v384
      %545 = vmatprep.subr.bf16.mxu0 0
      %546 = vmatpush1.bf16.msra.mxu0 %v387
      %547 = vmatprep.subr.bf16.mxu0 0
      %548 = vmatpush1.bf16.msra.mxu0 %v390
      %549 = vmatprep.subr.bf16.mxu0 0
      %550 = vmatpush1.bf16.msra.mxu0 %v393
      %551 = vmatprep.subr.bf16.mxu0 0
      %552 = vmatpush1.bf16.msra.mxu0 %v396
      %553 = vmatprep.subr.bf16.mxu0 0
      %554 = vmatpush1.bf16.msra.mxu0 %v399
      %555 = vmatprep.subr.bf16.mxu0 0
      %556 = vmatpush1.bf16.msra.mxu0 %v402
      %557 = vmatprep.subr.bf16.mxu0 0
      %558 = vmatpush1.bf16.msra.mxu0 %v405
      %559 = vmatprep.subr.bf16.mxu0 0
      %560 = vmatpush1.bf16.msra.mxu0 0
      %561 = vmatprep.subr.bf16.mxu0 0
      %562 = vmatpush1.bf16.msra.mxu0 0
      %563 = vmatprep.subr.bf16.mxu0 0
      %564 = vmatpush1.bf16.msra.mxu0 0
      %565 = vmatprep.subr.bf16.mxu0 0
      %566 = vmatpush1.bf16.msra.mxu0 0
      %567 = vmatprep.subr.bf16.mxu0 0
      %568 = vmatpush1.bf16.msra.mxu0 0
      %569 = vmatprep.subr.bf16.mxu0 0
      %570 = vmatpush1.bf16.msra.mxu0 0
      %571 = vmatprep.subr.bf16.mxu0 0
      %572 = vmatpush1.bf16.msra.mxu0 0
      %573 = vmatprep.subr.bf16.mxu0 0
      %574 = vmatpush1.bf16.msra.mxu0 0
      %575 = vmatprep.mubr.bf16.mxu0 0
      %576 = vmatmul.mubr.bf16.gmra.mrb[0].mxu0 %v245
      %v577 = vpop.f32.mrb[0].mxu0
      %v578 = vadd.f32 %v298, %v577
      %v579 = vpop.f32.mrb[0].mxu0
      %v580 = vpop.f32.mrb[0].mxu0
      %v581 = vadd.f32 %v298, %v580
      %v582 = vpop.f32.mrb[0].mxu0
      %583 = vmatprep.mubr.bf16.mxu0 0
      %584 = vmatmul.mubr.bf16.gmra.mrb[0].mxu0 %v246
      %v585 = vpop.f32.mrb[0].mxu0
      %v586 = vadd.f32 %v298, %v585
      %v587 = vpop.f32.mrb[0].mxu0
      %v588 = vpop.f32.mrb[0].mxu0
      %v589 = vadd.f32 %v298, %v588
      %v590 = vpop.f32.mrb[0].mxu0
      %591 = vmatprep.mubr.bf16.mxu0 0
      %592 = vmatmul.mubr.bf16.gmra.mrb[0].mxu0 %v247
      %v593 = vpop.f32.mrb[0].mxu0
      %v594 = vadd.f32 %v298, %v593
      %v595 = vpop.f32.mrb[0].mxu0
      %v596 = vpop.f32.mrb[0].mxu0
      %v597 = vadd.f32 %v298, %v596
      %v598 = vpop.f32.mrb[0].mxu0
      %599 = vmatprep.mubr.bf16.mxu0 0
      %600 = vmatmul.mubr.bf16.gmra.mrb[0].mxu0 %v248
      %v601 = vpop.f32.mrb[0].mxu0
      %v602 = vadd.f32 %v298, %v601
      %v603 = vpop.f32.mrb[0].mxu0
      %v604 = vpop.f32.mrb[0].mxu0
      %v605 = vadd.f32 %v298, %v604
      %v606 = vpop.f32.mrb[0].mxu0
      %607 = vmatprep.mubr.bf16.mxu0 0
      %608 = vmatmul.mubr.bf16.gmra.mrb[0].mxu0 %v249
      %v609 = vpop.f32.mrb[0].mxu0
      %v610 = vadd.f32 %v298, %v609
      %v611 = vpop.f32.mrb[0].mxu0
      %v612 = vpop.f32.mrb[0].mxu0
      %v613 = vadd.f32 %v298, %v612
      %v614 = vpop.f32.mrb[0].mxu0
      %615 = vmatprep.mubr.bf16.mxu0 0
      %616 = vmatmul.mubr.bf16.gmra.mrb[0].mxu0 %v250
      %v617 = vpop.f32.mrb[0].mxu0
      %v618 = vadd.f32 %v298, %v617
      %v619 = vpop.f32.mrb[0].mxu0
      %v620 = vpop.f32.mrb[0].mxu0
      %v621 = vadd.f32 %v298, %v620
      %v622 = vpop.f32.mrb[0].mxu0
      %623 = vmatprep.mubr.bf16.mxu0 0
      %624 = vmatmul.mubr.bf16.gmra.mrb[0].mxu0 %v251
      %v625 = vpop.f32.mrb[0].mxu0
      %v626 = vadd.f32 %v298, %v625
      %v627 = vpop.f32.mrb[0].mxu0
      %v628 = vpop.f32.mrb[0].mxu0
      %v629 = vadd.f32 %v298, %v628
      %v630 = vpop.f32.mrb[0].mxu0
      %631 = vmatprep.mubr.bf16.mxu0 0
      %632 = vmatmul.mubr.bf16.gmra.mrb[0].mxu0 %v252
      %v633 = vpop.f32.mrb[0].mxu0
      %v634 = vadd.f32 %v298, %v633
      %v635 = vpop.f32.mrb[0].mxu0
      %v636 = vpop.f32.mrb[0].mxu0
      %v637 = vadd.f32 %v298, %v636
      %v638 = vpop.f32.mrb[0].mxu0
      %639 = vdwg.mxu0
      %v640 = vmax.f32 %v465, 0.0
      %v641 = vmax.f32 %v467, 0.0
      %v642 = vmax.f32 %v578, 0.0
      %v643 = vmax.f32 %v469, 0.0
      %v644 = vmax.f32 %v471, 0.0
      %v645 = vmax.f32 %v581, 0.0
      %v646 = vmax.f32 %v475, 0.0
      %v647 = vmax.f32 %v477, 0.0
      %v648 = vmax.f32 %v586, 0.0
      %v649 = vmax.f32 %v479, 0.0
      %v650 = vmax.f32 %v481, 0.0
      %v651 = vmax.f32 %v589, 0.0
      %v652 = vmax.f32 %v485, 0.0
      %v653 = vmax.f32 %v487, 0.0
      %v654 = vmax.f32 %v594, 0.0
      %v655 = vmax.f32 %v489, 0.0
      %v656 = vmax.f32 %v491, 0.0
      %v657 = vmax.f32 %v597, 0.0
      %v658 = vmax.f32 %v495, 0.0
      %v659 = vmax.f32 %v497, 0.0
      %v660 = vmax.f32 %v602, 0.0
      %v661 = vmax.f32 %v499, 0.0
      %v662 = vmax.f32 %v501, 0.0
      %v663 = vmax.f32 %v605, 0.0
      %v664 = vmax.f32 %v505, 0.0
      %v665 = vmax.f32 %v507, 0.0
      %v666 = vmax.f32 %v610, 0.0
      %v667 = vmax.f32 %v509, 0.0
      %v668 = vmax.f32 %v511, 0.0
      %v669 = vmax.f32 %v613, 0.0
      %v670 = vmax.f32 %v515, 0.0
      %v671 = vmax.f32 %v517, 0.0
      %v672 = vmax.f32 %v618, 0.0
      %v673 = vmax.f32 %v519, 0.0
      %v674 = vmax.f32 %v521, 0.0
      %v675 = vmax.f32 %v621, 0.0
      %v676 = vmax.f32 %v525, 0.0
      %v677 = vmax.f32 %v527, 0.0
      %v678 = vmax.f32 %v626, 0.0
      %v679 = vmax.f32 %v529, 0.0
      %v680 = vmax.f32 %v531, 0.0
      %v681 = vmax.f32 %v629, 0.0
      %v682 = vmax.f32 %v535, 0.0
      %v683 = vmax.f32 %v537, 0.0
      %v684 = vmax.f32 %v634, 0.0
      %v685 = vmax.f32 %v539, 0.0
      %v686 = vmax.f32 %v541, 0.0
      %v687 = vmax.f32 %v637, 0.0
      %v688 = vpack.c.bf16 %v643, %v640
      %v689 = vpack.c.bf16 %v644, %v641
      %v690 = vpack.c.bf16 %v645, %v642
      %v691 = vpack.c.bf16 %v649, %v646
      %v692 = vpack.c.bf16 %v650, %v647
      %v693 = vpack.c.bf16 %v651, %v648
      %v694 = vpack.c.bf16 %v655, %v652
      %v695 = vpack.c.bf16 %v656, %v653
      %v696 = vpack.c.bf16 %v657, %v654
      %v697 = vpack.c.bf16 %v661, %v658
      %v698 = vpack.c.bf16 %v662, %v659
      %v699 = vpack.c.bf16 %v663, %v660
      %v700 = vpack.c.bf16 %v667, %v664
      %v701 = vpack.c.bf16 %v668, %v665
      %v702 = vpack.c.bf16 %v669, %v666
      %v703 = vpack.c.bf16 %v673, %v670
      %v704 = vpack.c.bf16 %v674, %v671
      %v705 = vpack.c.bf16 %v675, %v672
      %v706 = vpack.c.bf16 %v679, %v676
      %v707 = vpack.c.bf16 %v680, %v677
      %v708 = vpack.c.bf16 %v681, %v678
      %v709 = vpack.c.bf16 %v685, %v682
      %v710 = vpack.c.bf16 %v686, %v683
      %v711 = vpack.c.bf16 %v687, %v684
      %v712 = vld [vmem:[%s3] sm:$0xf]
      %v713 = vld [vmem:[%s3 + $0x4] sm:$0xf]
      %v714 = vld [vmem:[%s3 + $0x8] sm:$0xf]
      %v715 = vld [vmem:[%s3 + $0xc] sm:$0xf]
      %v716 = vld [vmem:[%s3 + $0x10] sm:$0xf]
      %v717 = vld [vmem:[%s3 + $0x14] sm:$0xf]
      %v718 = vld [vmem:[%s3 + $0x18] sm:$0xf]
      %v719 = vld [vmem:[%s3 + $0x1c] sm:$0xf]
      %v720 = vld [vmem:[%s3 + $0x20] sm:$0xf]
      %v721 = vld [vmem:[%s3 + $0x24] sm:$0xf]
      %v722 = vld [vmem:[%s3 + $0x28] sm:$0xf]
      %v723 = vld [vmem:[%s3 + $0x2c] sm:$0xf]
      %v724 = vld [vmem:[%s3 + $0x30] sm:$0xf]
      %v725 = vld [vmem:[%s3 + $0x34] sm:$0xf]
      %v726 = vld [vmem:[%s3 + $0x38] sm:$0xf]
      %v727 = vld [vmem:[%s3 + $0x3c] sm:$0xf]
      %v728 = vld [vmem:[%s3 + $0x40] sm:$0xf]
      %v729 = vld [vmem:[%s3 + $0x44] sm:$0xf]
      %v730 = vld [vmem:[%s3 + $0x48] sm:$0xf]
      %v731 = vld [vmem:[%s3 + $0x4c] sm:$0xf]
      %v732 = vld [vmem:[%s3 + $0x50] sm:$0xf]
      %v733 = vld [vmem:[%s3 + $0x54] sm:$0xf]
      %v734 = vld [vmem:[%s3 + $0x58] sm:$0xf]
      %v735 = vld [vmem:[%s3 + $0x5c] sm:$0xf]
      %v736 = vld [vmem:[%s3 + $0x60] sm:$0xf]
      %v737 = vld [vmem:[%s3 + $0x64] sm:$0xf]
      %v738 = vld [vmem:[%s3 + $0x68] sm:$0xf]
      %v739 = vld [vmem:[%s3 + $0x6c] sm:$0xf]
      %v740 = vld [vmem:[%s3 + $0x70] sm:$0xf]
      %v741 = vld [vmem:[%s3 + $0x74] sm:$0xf]
      %v742 = vld [vmem:[%s3 + $0x78] sm:$0xf]
      %v743 = vld [vmem:[%s3 + $0x7c] sm:$0xf]
      %v744 = vld [vmem:[%s3 + $0x80] sm:$0xf]
      %v745 = vld [vmem:[%s3 + $0x84] sm:$0xf]
      %v746 = vld [vmem:[%s3 + $0x88] sm:$0xf]
      %v747 = vld [vmem:[%s3 + $0x8c] sm:$0xf]
      %v748 = vld [vmem:[%s3 + $0x90] sm:$0xf]
      %v749 = vld [vmem:[%s3 + $0x94] sm:$0xf]
      %v750 = vld [vmem:[%s3 + $0x98] sm:$0xf]
      %v751 = vld [vmem:[%s3 + $0x9c] sm:$0xf]
      %v752 = vld [vmem:[%s4] sm:$0x1]
      %v754 = vlaneseq
      %v755 = vshrl.u32 %v754, 7
      %v756 = vsub.s32 0, %v755
      %v757 = vrot.slane %v752, %v756
      %v799 = vunpack.c.l.b16 %v712
      %v800 = vunpack.c.l.b16 %v713
      %v801 = vunpack.c.l.b16 %v714
      %v802 = vunpack.c.l.b16 %v715
      %v803 = vunpack.c.l.b16 %v716
      %v804 = vunpack.c.l.b16 %v717
      %v805 = vunpack.c.l.b16 %v718
      %v806 = vunpack.c.l.b16 %v719
      %v807 = vunpack.c.l.b16 %v720
      %v808 = vunpack.c.l.b16 %v721
      %v809 = vunpack.c.l.b16 %v722
      %v810 = vunpack.c.l.b16 %v723
      %v811 = vunpack.c.l.b16 %v724
      %v812 = vunpack.c.l.b16 %v725
      %v813 = vunpack.c.l.b16 %v726
      %v814 = vunpack.c.l.b16 %v727
      %v815 = vunpack.c.l.b16 %v728
      %v816 = vunpack.c.l.b16 %v729
      %v817 = vunpack.c.l.b16 %v730
      %v818 = vunpack.c.l.b16 %v731
      %v819 = vunpack.c.l.b16 %v732
      %v820 = vunpack.c.l.b16 %v733
      %v821 = vunpack.c.l.b16 %v734
      %v822 = vunpack.c.l.b16 %v735
      %v823 = vunpack.c.l.b16 %v736
      %v824 = vunpack.c.l.b16 %v737
      %v825 = vunpack.c.l.b16 %v738
      %v826 = vunpack.c.l.b16 %v739
      %v827 = vunpack.c.l.b16 %v740
      %v828 = vunpack.c.l.b16 %v741
      %v829 = vunpack.c.l.b16 %v742
      %v830 = vunpack.c.l.b16 %v743
      %v831 = vunpack.c.l.b16 %v744
      %v832 = vunpack.c.l.b16 %v745
      %v833 = vunpack.c.l.b16 %v746
      %v834 = vunpack.c.l.b16 %v747
      %v835 = vunpack.c.l.b16 %v748
      %v836 = vunpack.c.l.b16 %v749
      %v837 = vunpack.c.l.b16 %v750
      %v838 = vunpack.c.l.b16 %v751
      %v839 = vpack.c.b16 %v800, %v799
      %v840 = vpack.c.b16 %v802, %v801
      %v841 = vpack.c.b16 %v804, %v803
      %v842 = vpack.c.b16 %v806, %v805
      %v843 = vpack.c.b16 %v808, %v807
      %v844 = vpack.c.b16 %v810, %v809
      %v845 = vpack.c.b16 %v812, %v811
      %v846 = vpack.c.b16 %v814, %v813
      %v847 = vpack.c.b16 %v816, %v815
      %v848 = vpack.c.b16 %v818, %v817
      %v849 = vpack.c.b16 %v820, %v819
      %v850 = vpack.c.b16 %v822, %v821
      %v851 = vpack.c.b16 %v824, %v823
      %v852 = vpack.c.b16 %v826, %v825
      %v853 = vpack.c.b16 %v828, %v827
      %v854 = vpack.c.b16 %v830, %v829
      %v855 = vpack.c.b16 %v832, %v831
      %v856 = vpack.c.b16 %v834, %v833
      %v857 = vpack.c.b16 %v836, %v835
      %v858 = vpack.c.b16 %v838, %v837
      %vm879 = vcmask 523264
      %v881 = vsel %vm879, %v690, 0
      %v884 = vsel %vm879, %v693, 0
      %v887 = vsel %vm879, %v696, 0
      %v890 = vsel %vm879, %v699, 0
      %v893 = vsel %vm879, %v702, 0
      %v896 = vsel %vm879, %v705, 0
      %v899 = vsel %vm879, %v708, 0
      %v902 = vsel %vm879, %v711, 0
      %904 = vmatprep.subr.bf16.mxu0 0
      %905 = vmatpush1.bf16.msra.mxu0 %v839
      %906 = vmatprep.subr.bf16.mxu0 0
      %907 = vmatpush1.bf16.msra.mxu0 %v840
      %908 = vmatprep.subr.bf16.mxu0 0
      %909 = vmatpush1.bf16.msra.mxu0 %v841
      %910 = vmatprep.subr.bf16.mxu0 0
      %911 = vmatpush1.bf16.msra.mxu0 %v842
      %912 = vmatprep.subr.bf16.mxu0 0
      %913 = vmatpush1.bf16.msra.mxu0 %v843
      %914 = vmatprep.subr.bf16.mxu0 0
      %915 = vmatpush1.bf16.msra.mxu0 %v844
      %916 = vmatprep.subr.bf16.mxu0 0
      %917 = vmatpush1.bf16.msra.mxu0 %v845
      %918 = vmatprep.subr.bf16.mxu0 0
      %919 = vmatpush1.bf16.msra.mxu0 %v846
      %920 = vmatprep.subr.bf16.mxu0 0
      %921 = vmatpush1.bf16.msra.mxu0 %v847
      %922 = vmatprep.subr.bf16.mxu0 0
      %923 = vmatpush1.bf16.msra.mxu0 %v848
      %924 = vmatprep.subr.bf16.mxu0 0
      %925 = vmatpush1.bf16.msra.mxu0 %v849
      %926 = vmatprep.subr.bf16.mxu0 0
      %927 = vmatpush1.bf16.msra.mxu0 %v850
      %928 = vmatprep.subr.bf16.mxu0 0
      %929 = vmatpush1.bf16.msra.mxu0 %v851
      %930 = vmatprep.subr.bf16.mxu0 0
      %931 = vmatpush1.bf16.msra.mxu0 %v852
      %932 = vmatprep.subr.bf16.mxu0 0
      %933 = vmatpush1.bf16.msra.mxu0 %v853
      %934 = vmatprep.subr.bf16.mxu0 0
      %935 = vmatpush1.bf16.msra.mxu0 %v854
      %936 = vmatprep.mubr.bf16.mxu0 %v689
      %937 = vmatmul.mubr.bf16.gmra.mrb[0].mxu0 %v688
      %v938 = vpop.f32.mrb[0].mxu0
      %v939 = vadd.f32 %v757, %v938
      %v940 = vpop.f32.mrb[0].mxu0
      %v941 = vpop.f32.mrb[0].mxu0
      %v942 = vadd.f32 %v757, %v941
      %v943 = vpop.f32.mrb[0].mxu0
      %944 = vmatprep.mubr.bf16.mxu0 %v692
      %945 = vmatmul.mubr.bf16.gmra.mrb[0].mxu0 %v691
      %v946 = vpop.f32.mrb[0].mxu0
      %v947 = vadd.f32 %v757, %v946
      %v948 = vpop.f32.mrb[0].mxu0
      %v949 = vpop.f32.mrb[0].mxu0
      %v950 = vadd.f32 %v757, %v949
      %v951 = vpop.f32.mrb[0].mxu0
      %952 = vmatprep.mubr.bf16.mxu0 %v695
      %953 = vmatmul.mubr.bf16.gmra.mrb[0].mxu0 %v694
      %v954 = vpop.f32.mrb[0].mxu0
      %v955 = vadd.f32 %v757, %v954
      %v956 = vpop.f32.mrb[0].mxu0
      %v957 = vpop.f32.mrb[0].mxu0
      %v958 = vadd.f32 %v757, %v957
      %v959 = vpop.f32.mrb[0].mxu0
      %960 = vmatprep.mubr.bf16.mxu0 %v698
      %961 = vmatmul.mubr.bf16.gmra.mrb[0].mxu0 %v697
      %v962 = vpop.f32.mrb[0].mxu0
      %v963 = vadd.f32 %v757, %v962
      %v964 = vpop.f32.mrb[0].mxu0
      %v965 = vpop.f32.mrb[0].mxu0
      %v966 = vadd.f32 %v757, %v965
      %v967 = vpop.f32.mrb[0].mxu0
      %968 = vmatprep.mubr.bf16.mxu0 %v701
      %969 = vmatmul.mubr.bf16.gmra.mrb[0].mxu0 %v700
      %v970 = vpop.f32.mrb[0].mxu0
      %v971 = vadd.f32 %v757, %v970
      %v972 = vpop.f32.mrb[0].mxu0
      %v973 = vpop.f32.mrb[0].mxu0
      %v974 = vadd.f32 %v757, %v973
      %v975 = vpop.f32.mrb[0].mxu0
      %976 = vmatprep.mubr.bf16.mxu0 %v704
      %977 = vmatmul.mubr.bf16.gmra.mrb[0].mxu0 %v703
      %v978 = vpop.f32.mrb[0].mxu0
      %v979 = vadd.f32 %v757, %v978
      %v980 = vpop.f32.mrb[0].mxu0
      %v981 = vpop.f32.mrb[0].mxu0
      %v982 = vadd.f32 %v757, %v981
      %v983 = vpop.f32.mrb[0].mxu0
      %984 = vmatprep.mubr.bf16.mxu0 %v707
      %985 = vmatmul.mubr.bf16.gmra.mrb[0].mxu0 %v706
      %v986 = vpop.f32.mrb[0].mxu0
      %v987 = vadd.f32 %v757, %v986
      %v988 = vpop.f32.mrb[0].mxu0
      %v989 = vpop.f32.mrb[0].mxu0
      %v990 = vadd.f32 %v757, %v989
      %v991 = vpop.f32.mrb[0].mxu0
      %992 = vmatprep.mubr.bf16.mxu0 %v710
      %993 = vmatmul.mubr.bf16.gmra.mrb[0].mxu0 %v709
      %v994 = vpop.f32.mrb[0].mxu0
      %v995 = vadd.f32 %v757, %v994
      %v996 = vpop.f32.mrb[0].mxu0
      %v997 = vpop.f32.mrb[0].mxu0
      %v998 = vadd.f32 %v757, %v997
      %v999 = vpop.f32.mrb[0].mxu0
      %1000 = vdwg.mxu0
      %1001 = vmatprep.subr.bf16.mxu0 0
      %1002 = vmatpush1.bf16.msra.mxu0 %v855
      %1003 = vmatprep.subr.bf16.mxu0 0
      %1004 = vmatpush1.bf16.msra.mxu0 %v856
      %1005 = vmatprep.subr.bf16.mxu0 0
      %1006 = vmatpush1.bf16.msra.mxu0 %v857
      %1007 = vmatprep.subr.bf16.mxu0 0
      %1008 = vmatpush1.bf16.msra.mxu0 %v858
      %1009 = vmatprep.subr.bf16.mxu0 0
      %1010 = vmatpush1.bf16.msra.mxu0 0
      %1011 = vmatprep.subr.bf16.mxu0 0
      %1012 = vmatpush1.bf16.msra.mxu0 0
      %1013 = vmatprep.subr.bf16.mxu0 0
      %1014 = vmatpush1.bf16.msra.mxu0 0
      %1015 = vmatprep.subr.bf16.mxu0 0
      %1016 = vmatpush1.bf16.msra.mxu0 0
      %1017 = vmatprep.subr.bf16.mxu0 0
      %1018 = vmatpush1.bf16.msra.mxu0 0
      %1019 = vmatprep.subr.bf16.mxu0 0
      %1020 = vmatpush1.bf16.msra.mxu0 0
      %1021 = vmatprep.subr.bf16.mxu0 0
      %1022 = vmatpush1.bf16.msra.mxu0 0
      %1023 = vmatprep.subr.bf16.mxu0 0
      %1024 = vmatpush1.bf16.msra.mxu0 0
      %1025 = vmatprep.subr.bf16.mxu0 0
      %1026 = vmatpush1.bf16.msra.mxu0 0
      %1027 = vmatprep.subr.bf16.mxu0 0
      %1028 = vmatpush1.bf16.msra.mxu0 0
      %1029 = vmatprep.subr.bf16.mxu0 0
      %1030 = vmatpush1.bf16.msra.mxu0 0
      %1031 = vmatprep.subr.bf16.mxu0 0
      %1032 = vmatpush1.bf16.msra.mxu0 0
      %1033 = vmatprep.mubr.bf16.mxu0 0
      %1034 = vmatmul.mubr.bf16.gmra.mrb[0].mxu0 %v881
      %v1035 = vpop.f32.mrb[0].mxu0
      %v1036 = vadd.f32 %v939, %v1035
      %v1037 = vpop.f32.mrb[0].mxu0
      %v1038 = vpop.f32.mrb[0].mxu0
      %v1039 = vadd.f32 %v942, %v1038
      %v1040 = vpop.f32.mrb[0].mxu0
      %1041 = vmatprep.mubr.bf16.mxu0 0
      %1042 = vmatmul.mubr.bf16.gmra.mrb[0].mxu0 %v884
      %v1043 = vpop.f32.mrb[0].mxu0
      %v1044 = vadd.f32 %v947, %v1043
      %v1045 = vpop.f32.mrb[0].mxu0
      %v1046 = vpop.f32.mrb[0].mxu0
      %v1047 = vadd.f32 %v950, %v1046
      %v1048 = vpop.f32.mrb[0].mxu0
      %1049 = vmatprep.mubr.bf16.mxu0 0
      %1050 = vmatmul.mubr.bf16.gmra.mrb[0].mxu0 %v887
      %v1051 = vpop.f32.mrb[0].mxu0
      %v1052 = vadd.f32 %v955, %v1051
      %v1053 = vpop.f32.mrb[0].mxu0
      %v1054 = vpop.f32.mrb[0].mxu0
      %v1055 = vadd.f32 %v958, %v1054
      %v1056 = vpop.f32.mrb[0].mxu0
      %1057 = vmatprep.mubr.bf16.mxu0 0
      %1058 = vmatmul.mubr.bf16.gmra.mrb[0].mxu0 %v890
      %v1059 = vpop.f32.mrb[0].mxu0
      %v1060 = vadd.f32 %v963, %v1059
      %v1061 = vpop.f32.mrb[0].mxu0
      %v1062 = vpop.f32.mrb[0].mxu0
      %v1063 = vadd.f32 %v966, %v1062
      %v1064 = vpop.f32.mrb[0].mxu0
      %1065 = vmatprep.mubr.bf16.mxu0 0
      %1066 = vmatmul.mubr.bf16.gmra.mrb[0].mxu0 %v893
      %v1067 = vpop.f32.mrb[0].mxu0
      %v1068 = vadd.f32 %v971, %v1067
      %v1069 = vpop.f32.mrb[0].mxu0
      %v1070 = vpop.f32.mrb[0].mxu0
      %v1071 = vadd.f32 %v974, %v1070
      %v1072 = vpop.f32.mrb[0].mxu0
      %1073 = vmatprep.mubr.bf16.mxu0 0
      %1074 = vmatmul.mubr.bf16.gmra.mrb[0].mxu0 %v896
      %v1075 = vpop.f32.mrb[0].mxu0
      %v1076 = vadd.f32 %v979, %v1075
      %v1077 = vpop.f32.mrb[0].mxu0
      %v1078 = vpop.f32.mrb[0].mxu0
      %v1079 = vadd.f32 %v982, %v1078
      %v1080 = vpop.f32.mrb[0].mxu0
      %1081 = vmatprep.mubr.bf16.mxu0 0
      %1082 = vmatmul.mubr.bf16.gmra.mrb[0].mxu0 %v899
      %v1083 = vpop.f32.mrb[0].mxu0
      %v1084 = vadd.f32 %v987, %v1083
      %v1085 = vpop.f32.mrb[0].mxu0
      %v1086 = vpop.f32.mrb[0].mxu0
      %v1087 = vadd.f32 %v990, %v1086
      %v1088 = vpop.f32.mrb[0].mxu0
      %1089 = vmatprep.mubr.bf16.mxu0 0
      %1090 = vmatmul.mubr.bf16.gmra.mrb[0].mxu0 %v902
      %v1091 = vpop.f32.mrb[0].mxu0
      %v1092 = vadd.f32 %v995, %v1091
      %v1093 = vpop.f32.mrb[0].mxu0
      %v1094 = vpop.f32.mrb[0].mxu0
      %v1095 = vadd.f32 %v998, %v1094
      %v1096 = vpop.f32.mrb[0].mxu0
      %1097 = vdwg.mxu0
      %vm1098 = vcmask 785408
      %1099 = vst.msk [vmem:[%s226] sm:$0xff] %vm1098, %v1036
      %1100 = vst.msk [vmem:[%s226 + $0x8] sm:$0xff] %vm1098, %v1039
      %1101 = vst.msk [vmem:[%s226 + $0x10] sm:$0xff] %vm1098, %v1044
      %1102 = vst.msk [vmem:[%s226 + $0x18] sm:$0xff] %vm1098, %v1047
      %1103 = vst.msk [vmem:[%s226 + $0x20] sm:$0xff] %vm1098, %v1052
      %1104 = vst.msk [vmem:[%s226 + $0x28] sm:$0xff] %vm1098, %v1055
      %1105 = vst.msk [vmem:[%s226 + $0x30] sm:$0xff] %vm1098, %v1060
      %1106 = vst.msk [vmem:[%s226 + $0x38] sm:$0xff] %vm1098, %v1063
      %1107 = vst.msk [vmem:[%s226 + $0x40] sm:$0xff] %vm1098, %v1068
      %1108 = vst.msk [vmem:[%s226 + $0x48] sm:$0xff] %vm1098, %v1071
      %1109 = vst.msk [vmem:[%s226 + $0x50] sm:$0xff] %vm1098, %v1076
      %1110 = vst.msk [vmem:[%s226 + $0x58] sm:$0xff] %vm1098, %v1079
      %1111 = vst.msk [vmem:[%s226 + $0x60] sm:$0xff] %vm1098, %v1084
      %1112 = vst.msk [vmem:[%s226 + $0x68] sm:$0xff] %vm1098, %v1087
      %1113 = vst.msk [vmem:[%s226 + $0x70] sm:$0xff] %vm1098, %v1092
      %1114 = vst.msk [vmem:[%s226 + $0x78] sm:$0xff] %vm1098, %v1095
      %s1115 = smul.u32 16, %s16
      %p1116 = scmp.lt.s32.totalorder %s1115, 31
      %s1117 = scalar_select %p1116, %s1115, 31
      %s1118 = smul.addr %s1117, 8
      %s1119 = scalar_lea.vmem %s5, %s1118
      // Predicated region
      $region41: #{tpu_custom_call.1} parent=39 // pred_check
        %p1120 = pneg %p144
      $region42: #{tpu_custom_call.1} parent=39 // pred_check_branch
        %1122 = sbr.rel (%p1120) target = $region44
      $region43: #{tpu_custom_call.1} parent=39 // pred_region
        %s1123 = smul.u32 16, %s16
      $region44: #{tpu_custom_call.1} parent=39 // pred_fallthru
        _
    $region40: #{tpu_custom_call.1} parent=5 // pred_fallthru
      _
    %p1124 = scmp.le.s32.totalorder 2, %s11
    // Predicated region
    $region45: #{tpu_custom_call.1} parent=5 // pred_check
      %p1125 = pneg %p1124
    $region46: #{tpu_custom_call.1} parent=5 // pred_check_branch
      %1127 = sbr.rel (%p1125) target = $region48
    $region47: #{tpu_custom_call.1} parent=5 // pred_region
      %s1128 = ssub.s32 %s11, 2
      // Predicated region
      $region49: #{tpu_custom_call.1} parent=47 // pred_check
        %p1129 = pneg %p150
      $region50: #{tpu_custom_call.1} parent=47 // pred_check_branch
        %1131 = sbr.rel (%p1129) target = $region52
      $region51: #{tpu_custom_call.1} parent=47 // pred_region
        %s1132 = smul.u32 16, %s17
        %p1133 = scmp.lt.s32.totalorder %s1132, 31
        %s1134 = scalar_select %p1133, %s1132, 31
        %s1135 = smul.addr %s1134, 8
        %s1136 = scalar_lea.vmem %s5, %s1135
      $region52: #{tpu_custom_call.1} parent=47 // pred_fallthru
        _
    $region48: #{tpu_custom_call.1} parent=5 // pred_fallthru
      _
  $region6: #{tpu_custom_call.1} parent=0 // loop_footer
    %s15 = sadd.s32 1, %s11
  $region7: #{tpu_custom_call.1} parent=0 // loop_footer_branch
    %10 = sbr.rel target = $region3
  $region8: #{tpu_custom_call.1} parent=0 // loop_exit
    _

</llo_original>
